<compile_context>
chip_gen: v7x
topology: tpu7x:2x2x1
jax: 0.10.0
libtpu: 0.0.40
codegen_flags: <defaults>
</compile_context>

<pallas_src>
import numpy as np
import jax
import jax.numpy as jnp
from jax.experimental import pallas as pl
from jax.experimental.pallas import tpu as pltpu


# ---------------------------------------------------------------------------
# In-kernel math helpers (only ops that lower cleanly everywhere:
# exp/log/sqrt, polynomials, where).
# ---------------------------------------------------------------------------
def _std_normal_cdf(x):
    """Phi(x) via Abramowitz & Stegun 7.1.26 erf approximation (one exp)."""
    z = x * 0.7071067811865475  # x / sqrt(2)
    sgn = jnp.where(z >= 0.0, 1.0, -1.0)
    az = jnp.abs(z)
    t = 1.0 / (1.0 + 0.3275911 * az)
    poly = ((((1.061405429 * t - 1.453152027) * t + 1.421413741) * t
             - 0.284496736) * t + 0.254829592) * t
    erf_abs = 1.0 - poly * jnp.exp(-az * az)
    return 0.5 * (1.0 + sgn * erf_abs)


def _ndtri(p):
    """Inverse standard-normal CDF (Acklam), tails folded by symmetry.

    Assumes p already clipped to [1e-6, 1 - 1e-6].  Per element: 1 log +
    1 sqrt transcendental (tails) + one rational polynomial each for the
    tail and central branches.
    """
    a = (-3.969683028665376e+01, 2.209460984245205e+02, -2.759285104469687e+02,
         1.383577518672690e+02, -3.066479806614716e+01, 2.506628277459239e+00)
    b = (-5.447609879822406e+01, 1.615858368580409e+02, -1.556989798598866e+02,
         6.680131188771972e+01, -1.328068155288572e+01)
    c = (-7.784894002430293e-03, -3.223964580411365e-01, -2.400758277161838e+00,
         -2.549732539343734e+00, 4.374664141464968e+00, 2.938163982698783e+00)
    d = (7.784695709041462e-03, 3.224671290700398e-01, 2.445134137142996e+00,
         3.754408661907416e+00)
    p_low = 0.02425

    # Central region.
    q = p - 0.5
    r = q * q
    num_c = ((((a[0] * r + a[1]) * r + a[2]) * r + a[3]) * r + a[4]) * r + a[5]
    den_c = ((((b[0] * r + b[1]) * r + b[2]) * r + b[3]) * r + b[4]) * r + 1.0
    x_central = num_c * q / den_c

    # Tails: ndtri(p) = -ndtri(1 - p)  ->  evaluate once on pm = min(p, 1-p).
    pm = jnp.minimum(p, 1.0 - p)            # in [1e-6, 0.5]
    t = jnp.sqrt(-2.0 * jnp.log(pm))
    x_tail = (((((c[0] * t + c[1]) * t + c[2]) * t + c[3]) * t + c[4]) * t + c[5]) / \
             ((((d[0] * t + d[1]) * t + d[2]) * t + d[3]) * t + 1.0)
    x_tail = jnp.where(p < 0.5, x_tail, -x_tail)

    return jnp.where(pm < p_low, x_tail, x_central)


# ---------------------------------------------------------------------------
# Kernel: one row-tile of the transposed output Z^T [K, rows_tile].
# ---------------------------------------------------------------------------
def _map_to_cont_kernel(cls_ref, ub_ref, u_ref, zt_ref):
    K, T = zt_ref.shape                      # K on sublanes, rows on lanes

    ub = ub_ref[...]                         # [1, T] float32 upper bounds
    cls = cls_ref[...]                       # [1, T] int32 rescaled labels

    # Hoisted: Phi(ub) depends only on the row -> one exp per row, not per K.
    p_bound = _std_normal_cdf(ub)            # [1, T]

    # Inverse-CDF sampling of N(0,1) truncated to (-inf, ub]:
    #   z = Phi^{-1}( U * Phi(ub) )
    # [1, T] operands broadcast implicitly against [K, T]; nothing materialized.
    u01 = u_ref[...]                         # [K, T] uniforms in [0, 1)
    p = jnp.clip(u01 * p_bound, 1e-6, 1.0 - 1e-6)   # deliberate tiny tail clip
    z = _ndtri(p)

    # True-class entry gets the raw (un-truncated) upper bound.
    k_idx = jax.lax.broadcasted_iota(jnp.int32, (K, T), 0)
    zt_ref[...] = jnp.where(k_idx == cls, ub, z).astype(zt_ref.dtype)


# ---------------------------------------------------------------------------
# Wrapper (glue: unique/inverse on host, bound + uniform draws, pallas_call,
# final transpose back to [B, N, K]).
# ---------------------------------------------------------------------------
def _choose_rows_tile(R, K, target=512, max_block_bytes=4 * 1024 * 1024):
    """Row tile on the lane axis: full R if small, else a 128-multiple tile."""
    if R <= target:
        return R                              # full-dim block (always legal)
    t = target
    while t > 128 and t * K * 4 > max_block_bytes:
        t //= 2                               # keep blocks VMEM-friendly (v5e/v7x)
    return t


def mapping_to_continuous(C, mu, sigma, key):
    """C: [B, N] integer labels -> (Z [B, N, K] float32, C_new, upper_bounds)."""
    C_np = np.asarray(C)
    B, N = C_np.shape

    # TODO(synk): torch.unique has a data-dependent output size (K); computed on
    # host with numpy since Pallas needs static shapes. For steady-state perf,
    # pad K to a fixed bucket to avoid per-K recompiles.
    k_labels, c_new = np.unique(C_np, return_inverse=True)   # sorted unique
    K = int(k_labels.shape[0])
    c_new = c_new.reshape(B, N).astype(np.int32)

    R = B * N
    rows_tile = _choose_rows_tile(R, K)
    R_pad = ((R + rows_tile - 1) // rows_tile) * rows_tile

    k_ub, k_u = jax.random.split(key)
    ub = mu + sigma * jax.random.normal(k_ub, (B, N), dtype=jnp.float32)

    # TODO(synk): in-kernel pltpu.prng_random_bits would remove this [K, R]
    # HBM read, but the hardware PRNG has no interpret/CPU lowering, so the
    # uniforms are drawn in the wrapper instead.
    u = jax.random.uniform(k_u, (K, R_pad), dtype=jnp.float32)

    cls_row = jnp.asarray(c_new).reshape(1, R)                # [1, R] int32
    ub_row = ub.reshape(1, R)                                 # [1, R] f32
    if R_pad != R:
        pad = R_pad - R
        cls_row = jnp.pad(cls_row, ((0, 0), (0, pad)))
        ub_row = jnp.pad(ub_row, ((0, 0), (0, pad)))

    grid = (R_pad // rows_tile,)

    zt = pl.pallas_call(
        _map_to_cont_kernel,
        out_shape=jax.ShapeDtypeStruct((K, R_pad), jnp.float32),
        grid=grid,
        in_specs=[
            pl.BlockSpec((1, rows_tile), lambda i: (0, i)),   # C_new (row-major)
            pl.BlockSpec((1, rows_tile), lambda i: (0, i)),   # upper bounds
            pl.BlockSpec((K, rows_tile), lambda i: (0, i)),   # uniforms
        ],
        out_specs=pl.BlockSpec((K, rows_tile), lambda i: (0, i)),
        compiler_params=pltpu.CompilerParams(
            dimension_semantics=("parallel",)),
    )(cls_row, ub_row, u)

    # Layout plumbing back to the PyTorch output layout [B, N, K].
    Z = zt[:, :R].T.reshape(B, N, K)
    return Z, c_new, ub


if __name__ == "__main__":
    # Deterministic synthetic config / inputs.
    mu, sigma = 1.0, 0.5          # config.mapping_to_cont.{mu, sigma}
    B, N = 2, 8

    key = jax.random.PRNGKey(0)
    k_labels_key, k_rest = jax.random.split(key)
    label_vocab = jnp.array([2, 5, 7, 9], dtype=jnp.int32)   # up to K = 4 classes
    C = jax.random.choice(k_labels_key, label_vocab, shape=(B, N))

    Z, C_new, ub = mapping_to_continuous(C, mu, sigma, k_rest)
    Z = jax.block_until_ready(Z)

    # Sanity checks: shape, finiteness, and that the true-class entry equals
    # the (mu, sigma)-normal upper bound exactly.
    Z_np = np.asarray(Z)
    ub_np = np.asarray(ub)
    K = len(np.unique(np.asarray(C)))
    assert Z_np.shape == (B, N, K)
    assert np.all(np.isfinite(Z_np))
    picked = np.take_along_axis(Z_np, C_new[..., None], axis=2)[..., 0]
    assert np.array_equal(picked, ub_np)

    print("KERNEL_OK")
</pallas_src>

<mosaic_0001>
module attributes {stable_mosaic.version = 11 : i64} {
  func.func @_map_to_cont_kernel(%arg0: i32, %arg1: memref<1x16xi32, #tpu.memory_space<vmem>>, %arg2: memref<1x16xf32, #tpu.memory_space<vmem>>, %arg3: memref<4x16xf32, #tpu.memory_space<vmem>>, %arg4: memref<4x16xf32, #tpu.memory_space<vmem>>) attributes {dimension_semantics = [#tpu.dimension_semantics<parallel>], iteration_bounds = array<i64: 1>, scalar_prefetch = 0 : i64, scratch_operands = 0 : i64, tpu.core_type = #tpu.core_type<tc>, window_params = [{transform_indices = @transform_0, window_bounds = array<i64: 1, 16>}, {transform_indices = @transform_1, window_bounds = array<i64: 1, 16>}, {transform_indices = @transform_2, window_bounds = array<i64: 4, 16>}, {transform_indices = @transform_3, window_bounds = array<i64: 4, 16>}]} {
    %c0 = arith.constant 0 : index
    %c0_0 = arith.constant 0 : index
    %0 = vector.load %arg2[%c0, %c0_0] : memref<1x16xf32, #tpu.memory_space<vmem>>, vector<1x16xf32>
    %c0_1 = arith.constant 0 : index
    %c0_2 = arith.constant 0 : index
    %1 = vector.load %arg1[%c0_1, %c0_2] : memref<1x16xi32, #tpu.memory_space<vmem>>, vector<1x16xi32>
    %cst = arith.constant 0.707106769 : f32
    %2 = vector.broadcast %cst : f32 to vector<1x16xf32>
    %3 = arith.mulf %0, %2 : vector<1x16xf32>
    %cst_3 = arith.constant 0.000000e+00 : f32
    %4 = vector.broadcast %cst_3 : f32 to vector<1x16xf32>
    %5 = arith.cmpf oge, %3, %4 : vector<1x16xf32>
    %cst_4 = arith.constant 1.000000e+00 : f32
    %cst_5 = arith.constant -1.000000e+00 : f32
    %6 = vector.broadcast %cst_4 : f32 to vector<1x16xf32>
    %7 = vector.broadcast %cst_5 : f32 to vector<1x16xf32>
    %8 = arith.select %5, %6, %7 : vector<1x16xi1>, vector<1x16xf32>
    %9 = math.absf %3 : vector<1x16xf32>
    %cst_6 = arith.constant 0.327591091 : f32
    %10 = vector.broadcast %cst_6 : f32 to vector<1x16xf32>
    %11 = arith.mulf %10, %9 : vector<1x16xf32>
    %cst_7 = arith.constant 1.000000e+00 : f32
    %12 = vector.broadcast %cst_7 : f32 to vector<1x16xf32>
    %13 = arith.addf %12, %11 : vector<1x16xf32>
    %cst_8 = arith.constant 1.000000e+00 : f32
    %14 = vector.broadcast %cst_8 : f32 to vector<1x16xf32>
    %15 = arith.divf %14, %13 : vector<1x16xf32>
    %cst_9 = arith.constant 1.06140542 : f32
    %16 = vector.broadcast %cst_9 : f32 to vector<1x16xf32>
    %17 = arith.mulf %16, %15 : vector<1x16xf32>
    %cst_10 = arith.constant 1.45315206 : f32
    %18 = vector.broadcast %cst_10 : f32 to vector<1x16xf32>
    %19 = arith.subf %17, %18 : vector<1x16xf32>
    %20 = arith.mulf %19, %15 : vector<1x16xf32>
    %cst_11 = arith.constant 1.42141378 : f32
    %21 = vector.broadcast %cst_11 : f32 to vector<1x16xf32>
    %22 = arith.addf %20, %21 : vector<1x16xf32>
    %23 = arith.mulf %22, %15 : vector<1x16xf32>
    %cst_12 = arith.constant 0.284496725 : f32
    %24 = vector.broadcast %cst_12 : f32 to vector<1x16xf32>
    %25 = arith.subf %23, %24 : vector<1x16xf32>
    %26 = arith.mulf %25, %15 : vector<1x16xf32>
    %cst_13 = arith.constant 0.254829586 : f32
    %27 = vector.broadcast %cst_13 : f32 to vector<1x16xf32>
    %28 = arith.addf %26, %27 : vector<1x16xf32>
    %29 = arith.mulf %28, %15 : vector<1x16xf32>
    %cst_14 = arith.constant 0.000000e+00 : f32
    %30 = vector.broadcast %cst_14 : f32 to vector<1x16xf32>
    %31 = arith.subf %30, %9 : vector<1x16xf32>
    %32 = arith.mulf %31, %9 : vector<1x16xf32>
    %33 = math.exp %32 : vector<1x16xf32>
    %34 = arith.mulf %29, %33 : vector<1x16xf32>
    %cst_15 = arith.constant 1.000000e+00 : f32
    %35 = vector.broadcast %cst_15 : f32 to vector<1x16xf32>
    %36 = arith.subf %35, %34 : vector<1x16xf32>
    %37 = arith.mulf %8, %36 : vector<1x16xf32>
    %cst_16 = arith.constant 1.000000e+00 : f32
    %38 = vector.broadcast %cst_16 : f32 to vector<1x16xf32>
    %39 = arith.addf %38, %37 : vector<1x16xf32>
    %cst_17 = arith.constant 5.000000e-01 : f32
    %40 = vector.broadcast %cst_17 : f32 to vector<1x16xf32>
    %41 = arith.mulf %40, %39 : vector<1x16xf32>
    %c0_18 = arith.constant 0 : index
    %c0_19 = arith.constant 0 : index
    %42 = vector.load %arg3[%c0_18, %c0_19] : memref<4x16xf32, #tpu.memory_space<vmem>>, vector<4x16xf32>
    %43 = vector.broadcast %41 : vector<1x16xf32> to vector<4x16xf32>
    %44 = arith.mulf %42, %43 : vector<4x16xf32>
    %cst_20 = arith.constant 9.99999997E-7 : f32
    %cst_21 = arith.constant 0.999998986 : f32
    %45 = vector.broadcast %cst_20 : f32 to vector<4x16xf32>
    %46 = arith.maximumf %45, %44 : vector<4x16xf32>
    %47 = vector.broadcast %cst_21 : f32 to vector<4x16xf32>
    %48 = arith.minimumf %47, %46 : vector<4x16xf32>
    %cst_22 = arith.constant 5.000000e-01 : f32
    %49 = vector.broadcast %cst_22 : f32 to vector<4x16xf32>
    %50 = arith.subf %48, %49 : vector<4x16xf32>
    %51 = arith.mulf %50, %50 : vector<4x16xf32>
    %cst_23 = arith.constant -39.6968307 : f32
    %52 = vector.broadcast %cst_23 : f32 to vector<4x16xf32>
    %53 = arith.mulf %52, %51 : vector<4x16xf32>
    %cst_24 = arith.constant 220.946106 : f32
    %54 = vector.broadcast %cst_24 : f32 to vector<4x16xf32>
    %55 = arith.addf %53, %54 : vector<4x16xf32>
    %56 = arith.mulf %55, %51 : vector<4x16xf32>
    %cst_25 = arith.constant -275.928497 : f32
    %57 = vector.broadcast %cst_25 : f32 to vector<4x16xf32>
    %58 = arith.addf %56, %57 : vector<4x16xf32>
    %59 = arith.mulf %58, %51 : vector<4x16xf32>
    %cst_26 = arith.constant 138.357758 : f32
    %60 = vector.broadcast %cst_26 : f32 to vector<4x16xf32>
    %61 = arith.addf %59, %60 : vector<4x16xf32>
    %62 = arith.mulf %61, %51 : vector<4x16xf32>
    %cst_27 = arith.constant -30.6647987 : f32
    %63 = vector.broadcast %cst_27 : f32 to vector<4x16xf32>
    %64 = arith.addf %62, %63 : vector<4x16xf32>
    %65 = arith.mulf %64, %51 : vector<4x16xf32>
    %cst_28 = arith.constant 2.50662827 : f32
    %66 = vector.broadcast %cst_28 : f32 to vector<4x16xf32>
    %67 = arith.addf %65, %66 : vector<4x16xf32>
    %cst_29 = arith.constant -54.4760971 : f32
    %68 = vector.broadcast %cst_29 : f32 to vector<4x16xf32>
    %69 = arith.mulf %68, %51 : vector<4x16xf32>
    %cst_30 = arith.constant 161.585831 : f32
    %70 = vector.broadcast %cst_30 : f32 to vector<4x16xf32>
    %71 = arith.addf %69, %70 : vector<4x16xf32>
    %72 = arith.mulf %71, %51 : vector<4x16xf32>
    %cst_31 = arith.constant -155.698975 : f32
    %73 = vector.broadcast %cst_31 : f32 to vector<4x16xf32>
    %74 = arith.addf %72, %73 : vector<4x16xf32>
    %75 = arith.mulf %74, %51 : vector<4x16xf32>
    %cst_32 = arith.constant 66.8013153 : f32
    %76 = vector.broadcast %cst_32 : f32 to vector<4x16xf32>
    %77 = arith.addf %75, %76 : vector<4x16xf32>
    %78 = arith.mulf %77, %51 : vector<4x16xf32>
    %cst_33 = arith.constant -13.2806816 : f32
    %79 = vector.broadcast %cst_33 : f32 to vector<4x16xf32>
    %80 = arith.addf %78, %79 : vector<4x16xf32>
    %81 = arith.mulf %80, %51 : vector<4x16xf32>
    %cst_34 = arith.constant 1.000000e+00 : f32
    %82 = vector.broadcast %cst_34 : f32 to vector<4x16xf32>
    %83 = arith.addf %81, %82 : vector<4x16xf32>
    %84 = arith.mulf %67, %50 : vector<4x16xf32>
    %85 = arith.divf %84, %83 : vector<4x16xf32>
    %cst_35 = arith.constant 1.000000e+00 : f32
    %86 = vector.broadcast %cst_35 : f32 to vector<4x16xf32>
    %87 = arith.subf %86, %48 : vector<4x16xf32>
    %88 = arith.minimumf %48, %87 : vector<4x16xf32>
    %89 = math.log %88 : vector<4x16xf32>
    %cst_36 = arith.constant -2.000000e+00 : f32
    %90 = vector.broadcast %cst_36 : f32 to vector<4x16xf32>
    %91 = arith.mulf %90, %89 : vector<4x16xf32>
    %92 = math.sqrt %91 : vector<4x16xf32>
    %cst_37 = arith.constant -0.0077848942 : f32
    %93 = vector.broadcast %cst_37 : f32 to vector<4x16xf32>
    %94 = arith.mulf %93, %92 : vector<4x16xf32>
    %cst_38 = arith.constant -0.322396457 : f32
    %95 = vector.broadcast %cst_38 : f32 to vector<4x16xf32>
    %96 = arith.addf %94, %95 : vector<4x16xf32>
    %97 = arith.mulf %96, %92 : vector<4x16xf32>
    %cst_39 = arith.constant -2.40075827 : f32
    %98 = vector.broadcast %cst_39 : f32 to vector<4x16xf32>
    %99 = arith.addf %97, %98 : vector<4x16xf32>
    %100 = arith.mulf %99, %92 : vector<4x16xf32>
    %cst_40 = arith.constant -2.54973245 : f32
    %101 = vector.broadcast %cst_40 : f32 to vector<4x16xf32>
    %102 = arith.addf %100, %101 : vector<4x16xf32>
    %103 = arith.mulf %102, %92 : vector<4x16xf32>
    %cst_41 = arith.constant 4.37466431 : f32
    %104 = vector.broadcast %cst_41 : f32 to vector<4x16xf32>
    %105 = arith.addf %103, %104 : vector<4x16xf32>
    %106 = arith.mulf %105, %92 : vector<4x16xf32>
    %cst_42 = arith.constant 2.938164 : f32
    %107 = vector.broadcast %cst_42 : f32 to vector<4x16xf32>
    %108 = arith.addf %106, %107 : vector<4x16xf32>
    %cst_43 = arith.constant 0.00778469583 : f32
    %109 = vector.broadcast %cst_43 : f32 to vector<4x16xf32>
    %110 = arith.mulf %109, %92 : vector<4x16xf32>
    %cst_44 = arith.constant 0.322467119 : f32
    %111 = vector.broadcast %cst_44 : f32 to vector<4x16xf32>
    %112 = arith.addf %110, %111 : vector<4x16xf32>
    %113 = arith.mulf %112, %92 : vector<4x16xf32>
    %cst_45 = arith.constant 2.44513416 : f32
    %114 = vector.broadcast %cst_45 : f32 to vector<4x16xf32>
    %115 = arith.addf %113, %114 : vector<4x16xf32>
    %116 = arith.mulf %115, %92 : vector<4x16xf32>
    %cst_46 = arith.constant 3.7544086 : f32
    %117 = vector.broadcast %cst_46 : f32 to vector<4x16xf32>
    %118 = arith.addf %116, %117 : vector<4x16xf32>
    %119 = arith.mulf %118, %92 : vector<4x16xf32>
    %cst_47 = arith.constant 1.000000e+00 : f32
    %120 = vector.broadcast %cst_47 : f32 to vector<4x16xf32>
    %121 = arith.addf %119, %120 : vector<4x16xf32>
    %122 = arith.divf %108, %121 : vector<4x16xf32>
    %cst_48 = arith.constant 5.000000e-01 : f32
    %123 = vector.broadcast %cst_48 : f32 to vector<4x16xf32>
    %124 = arith.cmpf olt, %48, %123 : vector<4x16xf32>
    %cst_49 = arith.constant 0.000000e+00 : f32
    %125 = vector.broadcast %cst_49 : f32 to vector<4x16xf32>
    %126 = arith.subf %125, %122 : vector<4x16xf32>
    %127 = arith.select %124, %122, %126 : vector<4x16xi1>, vector<4x16xf32>
    %cst_50 = arith.constant 2.425000e-02 : f32
    %128 = vector.broadcast %cst_50 : f32 to vector<4x16xf32>
    %129 = arith.cmpf olt, %88, %128 : vector<4x16xf32>
    %130 = arith.select %129, %127, %85 : vector<4x16xi1>, vector<4x16xf32>
    %131 = tpu.iota {dimensions = array<i32: 0>} : vector<4x16xi32>
    %132 = vector.broadcast %1 : vector<1x16xi32> to vector<4x16xi32>
    %133 = arith.cmpi eq, %131, %132 : vector<4x16xi32>
    %134 = vector.shape_cast %0 : vector<1x16xf32> to vector<1x16xf32>
    %135 = vector.broadcast %134 : vector<1x16xf32> to vector<4x16xf32>
    %136 = arith.select %133, %135, %130 : vector<4x16xi1>, vector<4x16xf32>
    %c0_51 = arith.constant 0 : index
    %c0_52 = arith.constant 0 : index
    %137 = vector.load %arg4[%c0_51, %c0_52] : memref<4x16xf32, #tpu.memory_space<vmem>>, vector<4x16xf32>
    tpu.vector_store %arg4[%c0_51, %c0_52], %136 {strides = array<i32>} : memref<4x16xf32, #tpu.memory_space<vmem>>, vector<4x16xf32>,
    return
  }
  func.func @transform_0(%arg0: i32) -> (i32, i32) {
    %c0_i32 = arith.constant 0 : i32
    %c0_i32_0 = arith.constant 0 : i32
    return %c0_i32, %arg0 : i32, i32
  }
  func.func @transform_1(%arg0: i32) -> (i32, i32) {
    %c0_i32 = arith.constant 0 : i32
    %c0_i32_0 = arith.constant 0 : i32
    return %c0_i32, %arg0 : i32, i32
  }
  func.func @transform_2(%arg0: i32) -> (i32, i32) {
    %c0_i32 = arith.constant 0 : i32
    %c0_i32_0 = arith.constant 0 : i32
    return %c0_i32, %arg0 : i32, i32
  }
  func.func @transform_3(%arg0: i32) -> (i32, i32) {
    %c0_i32 = arith.constant 0 : i32
    %c0_i32_0 = arith.constant 0 : i32
    return %c0_i32, %arg0 : i32, i32
  }
}

</mosaic_0001>

<llo_original>
// kernel: tpu_custom_call.1
$region0: #{tpu_custom_call.1}
  #allocation0 [shape = 'u32[]', space=smem, size = 0x4, offset = 0x4, fixed_abs, tag = 'smem constant byte address 0x4 - core index']
  #allocation1 [shape = 'u32[144,128]{1,0:T(1,128)}', space=vmem, size = 0x12000, scoped, tag = 'internal scratch']
  %s0 = inlined_call_operand.hbm [shape: s32[1,16], index: 0, kind: input, shape index: {}]
  %s1 = inlined_call_operand.vmem [shape: f32[1,16], index: 1, kind: input, shape index: {}]
  %s2 = inlined_call_operand.vmem [shape: f32[4,16], index: 2, kind: input, shape index: {}]
  %s3 = inlined_call_operand.hbm [shape: f32[4,16], index: 3, kind: output, shape index: {}]
  %s4 = sld [smem:[#allocation0]]
  $region26: #{tpu_custom_call.1} parent=0
    _
  %s6 = ssub.s32 1, %s4
  %s7 = scalar_select 0, %s6, %s4
  $region1: #{tpu_custom_call.1} parent=0
    #allocation2 [shape = 'u8[512]{0}', space=vmem, size = 0x400, scoped, tag = 'input window, operand 0, single buffered']
    #allocation3 [shape = 's32[1]{0}', space=sflag, size = 0x4, scoped, tag = 'scoped memory for tpu_custom_call.1']
    #allocation4 [shape = 's32[1]{0}', space=sflag, size = 0x4, scoped, tag = 'scoped memory for tpu_custom_call.1']
    #allocation5 [shape = 'u8[2048]{0}', space=vmem, size = 0x800, scoped, tag = 'output window, operand 0, single buffered']
    %8 = vsyncpa [#allocation3], 0
    %9 = vsyncpa [#allocation4], 0
    // Predicated region
    $region2: #{tpu_custom_call.1} parent=1 // pred_check
      _
    $region3: #{tpu_custom_call.1} parent=1 // pred_check_branch
      %11 = sbr.rel (0) target = $region5
    $region4: #{tpu_custom_call.1} parent=1 // pred_region
      %s13 = ssub.s32 16, 16
      %14 = vsyncadd [#allocation3], %s13
      %s16 = sshll.u32 [#allocation2], 4
      %s17 = int_to_ptr.vmem [resolvable:$true] %s16
      %19 = dma.hbm_to_vmem [thread:$0]  %s0, 16, %s17, [#allocation3]
    $region5: #{tpu_custom_call.1} parent=1 // pred_fallthru
      _
    // Predicated region
    $region6: #{tpu_custom_call.1} parent=1 // pred_check
      _
    $region7: #{tpu_custom_call.1} parent=1 // pred_check_branch
      %21 = sbr.rel (0) target = $region9
    $region8: #{tpu_custom_call.1} parent=1 // pred_region
      _
    $region9: #{tpu_custom_call.1} parent=1 // pred_fallthru
      _
    // Predicated region
    $region10: #{tpu_custom_call.1} parent=1 // pred_check
      _
    $region11: #{tpu_custom_call.1} parent=1 // pred_check_branch
      %23 = sbr.rel (0) target = $region13
    $region12: #{tpu_custom_call.1} parent=1 // pred_region
      _
    $region13: #{tpu_custom_call.1} parent=1 // pred_fallthru
      _
    // Predicated region
    $region14: #{tpu_custom_call.1} parent=1 // pred_check
      _
    $region15: #{tpu_custom_call.1} parent=1 // pred_check_branch
      %25 = sbr.rel (0) target = $region17
    $region16: #{tpu_custom_call.1} parent=1 // pred_region
      %26 = dma.done [#allocation3], 16
    $region17: #{tpu_custom_call.1} parent=1 // pred_fallthru
      _
    %v27 = vld [vmem:[%s1] sm:$0x1]
    %v28 = vld [vmem:[#allocation2] sm:$0x1]
    %v29 = vmul.f32 %v27, 0.70710677
    %vm30 = vcmp.ge.f32.partialorder %v29, 0.0
    %v31 = vsel %vm30, 1.0, -1.0
    %v32 = vand.u32 2147483647, %v29
    %v33 = vmul.f32 %v32, 0.3275911
    %v34 = vadd.f32 %v33, 1.0
    %v35 = vrcp.pop %v34
    %v36 = vmul.f32 1.0, %v35
    %v37 = vmul.f32 %v36, 1.0614054
    %v38 = vsub.f32 %v37, 1.4531521
    %v39 = vmul.f32 %v38, %v36
    %v40 = vadd.f32 %v39, 1.4214138
    %v41 = vmul.f32 %v40, %v36
    %v42 = vsub.f32 %v41, 0.28449672
    %v43 = vmul.f32 %v42, %v36
    %v44 = vadd.f32 %v43, 0.2548296
    %v45 = vmul.f32 %v44, %v36
    %v46 = vsub.f32 0.0, %v32
    %v47 = vmul.f32 %v46, %v32
    %v48 = vmul.f32 %v47, 1.442695
    %v49 = vpow.pop %v48
    %v50 = vmul.f32 %v45, %v49
    %v51 = vsub.f32 1.0, %v50
    %v52 = vmul.f32 %v31, %v51
    %v53 = vadd.f32 %v52, 1.0
    %v54 = vmul.f32 %v53, 0.5
    %v55 = vld [vmem:[%s2] sm:$0xf]
    %v57 = vlaneseq
    %v58 = vshrl.u32 %v57, 7
    %v59 = vsub.s32 0, %v58
    %v60 = vrot.slane %v54, %v59
    %v62 = vmul.f32 %v55, %v60
    %v63 = vmax.f32 %v62, 1e-06
    %v64 = vmin.f32 %v63, 0.999999
    %v65 = vsub.f32 %v64, 0.5
    %v66 = vmul.f32 %v65, %v65
    %v67 = vmul.f32 %v66, -39.69683
    %v68 = vadd.f32 %v67, 220.9461
    %v69 = vmul.f32 %v68, %v66
    %v70 = vadd.f32 %v69, -275.9285
    %v71 = vmul.f32 %v70, %v66
    %v72 = vadd.f32 %v71, 138.35776
    %v73 = vmul.f32 %v72, %v66
    %v74 = vadd.f32 %v73, -30.664799
    %v75 = vmul.f32 %v74, %v66
    %v76 = vadd.f32 %v75, 2.5066283
    %v77 = vmul.f32 %v66, -54.476097
    %v78 = vadd.f32 %v77, 161.58583
    %v79 = vmul.f32 %v78, %v66
    %v80 = vadd.f32 %v79, -155.69897
    %v81 = vmul.f32 %v80, %v66
    %v82 = vadd.f32 %v81, 66.801315
    %v83 = vmul.f32 %v82, %v66
    %v84 = vadd.f32 %v83, -13.280682
    %v85 = vmul.f32 %v84, %v66
    %v86 = vadd.f32 %v85, 1.0
    %v87 = vmul.f32 %v76, %v65
    %v88 = vrcp.pop %v86
    %v89 = vmul.f32 %v87, %v88
    %v90 = vsub.f32 1.0, %v64
    %v91 = vmin.f32 %v64, %v90
    %v92 = vlog2.pop %v91
    %v93 = vmul.f32 %v92, 0.6931472
    %v94 = vmul.f32 %v93, -2.0
    %v95 = vrsqrt.pop %v94
    %v96 = vmul.f32 %v94, %v95
    %vm97 = vcmp.eq.f32.partialorder %v94, inf
    %v98 = vsel %vm97, %v94, %v96
    %vm99 = vcmp.eq.f32.partialorder %v94, 0.0
    %v100 = vand.u32 %v94, 2147483648
    %v101 = vsel %vm99, %v100, %v98
    %v102 = vmul.f32 %v101, -0.007784894
    %v103 = vadd.f32 %v102, -0.32239646
    %v104 = vmul.f32 %v103, %v101
    %v105 = vadd.f32 %v104, -2.4007583
    %v106 = vmul.f32 %v105, %v101
    %v107 = vadd.f32 %v106, -2.5497324
    %v108 = vmul.f32 %v107, %v101
    %v109 = vadd.f32 %v108, 4.3746643
    %v110 = vmul.f32 %v109, %v101
    %v111 = vadd.f32 %v110, 2.938164
    %v112 = vmul.f32 %v101, 0.007784696
    %v113 = vadd.f32 %v112, 0.32246712
    %v114 = vmul.f32 %v113, %v101
    %v115 = vadd.f32 %v114, 2.4451342
    %v116 = vmul.f32 %v115, %v101
    %v117 = vadd.f32 %v116, 3.7544086
    %v118 = vmul.f32 %v117, %v101
    %v119 = vadd.f32 %v118, 1.0
    %v120 = vrcp.pop %v119
    %v121 = vmul.f32 %v111, %v120
    %vm122 = vcmp.lt.f32.partialorder %v64, 0.5
    %v123 = vsub.f32 0.0, %v121
    %v124 = vsel %vm122, %v121, %v123
    %vm125 = vcmp.lt.f32.partialorder %v91, 0.02425
    %v126 = vsel %vm125, %v124, %v89
    %v127 = vlaneseq
    %v128 = vshrl.u32 %v127, 7
    %v129 = vlaneseq
    %v130 = vshrl.u32 %v129, 7
    %v131 = vsub.s32 0, %v130
    %v132 = vrot.slane %v28, %v131
    %vm133 = vcmp.eq.s32.totalorder %v128, %v132
    %v135 = vlaneseq
    %v136 = vshrl.u32 %v135, 7
    %v137 = vsub.s32 0, %v136
    %v138 = vrot.slane %v27, %v137
    %v140 = vsel %vm133, %v138, %v126
    %vm141 = vcmask 125952
    %142 = vst.msk [vmem:[#allocation5] sm:$0xf] %vm141, %v140
    // Predicated region
    $region18: #{tpu_custom_call.1} parent=1 // pred_check
      _
    $region19: #{tpu_custom_call.1} parent=1 // pred_check_branch
      %144 = sbr.rel (0) target = $region21
    $region20: #{tpu_custom_call.1} parent=1 // pred_region
      %s146 = ssub.s32 64, 64
      %147 = vsyncadd [#allocation4], %s146
      %s149 = sshll.u32 [#allocation5], 4
      %s150 = int_to_ptr.vmem [resolvable:$true] %s149
      %152 = dma.vmem_to_hbm [thread:$0]  %s150, 64, %s3, [#allocation4]
    $region21: #{tpu_custom_call.1} parent=1 // pred_fallthru
      _
    // Predicated region
    $region22: #{tpu_custom_call.1} parent=1 // pred_check
      _
    $region23: #{tpu_custom_call.1} parent=1 // pred_check_branch
      %154 = sbr.rel (0) target = $region25
    $region24: #{tpu_custom_call.1} parent=1 // pred_region
      %155 = dma.done [#allocation4], 64
    $region25: #{tpu_custom_call.1} parent=1 // pred_fallthru
      _
    %156 = vsyncpa [#allocation3], 1
    %157 = vsyncpa [#allocation4], 1

</llo_original>
